<compile_context>
chip_gen: v7x
topology: tpu7x:2x2x1
jax: 0.10.0
libtpu: 0.0.40
codegen_flags: <defaults>
</compile_context>

<pallas_src>
import functools

import jax
import jax.numpy as jnp
from jax.experimental import pallas as pl
from jax.experimental.pallas import tpu as pltpu

_NUM_LAYERS = 8
_PAD = 128  # lane-dense feature width of the packed activation rows


def _mlp_ae_kernel(x_ref, w_ref, b_ref, o_ref):
    """One batch tile of the autoencoder (samples lane-packed, 4 per row).

    x_ref : [TB, PAD]          f32 activations (4 samples per 128-lane row)
    w_ref : [8, PAD, PAD]      bf16 block-diagonal per-layer weights, [in, out]
    b_ref : [8, 1, PAD]        f32 per-layer biases (tiled per sample slot)
    o_ref : [TB, PAD]          f32 reconstruction (padded lanes stay zero)
    """

    def lin(h, i):
        # bf16 MXU operands, f32 accumulation, f32 bias add.
        return jnp.dot(h.astype(jnp.bfloat16), w_ref[i],
                       preferred_element_type=jnp.float32) + b_ref[i]

    h = x_ref[...].astype(jnp.float32)

    # ----- encode -----
    h = jnp.tanh(lin(h, 0))
    h = h + jnp.tanh(lin(h, 1))
    h = h + jnp.tanh(lin(h, 2))
    h = lin(h, 3)                      # latent z

    # ----- decode -----
    h = jnp.tanh(lin(h, 4))
    h = h + jnp.tanh(lin(h, 5))
    h = h + jnp.tanh(lin(h, 6))
    o_ref[...] = lin(h, 7).astype(o_ref.dtype)


def _round_up(n, m):
    return ((n + m - 1) // m) * m


def _cdiv(a, b):
    return (a + b - 1) // b


def mlp_autoencoder_forward(x, w_slab, b_slab, *, input_dim, sub_width,
                            tile_batch=1024):
    """x: [B, input_dim] f32.  w_slab: [8, PAD, PAD] bf16.  b_slab: [8,1,PAD] f32."""
    B = x.shape[0]
    P = w_slab.shape[-1]
    S = sub_width
    G = P // S                               # samples packed per 128-lane row

    # Packed rows needed, rounded to the 8-sublane granule.
    rows = _cdiv(max(B, 1), G)
    rows8 = _round_up(rows, 8)

    # Batch tile: large (default 1024 rows) for DMA efficiency, multiple of 8,
    # and — when there is enough work — at least 2 grid steps so the parallel
    # batch axis can be split across v7x's two TensorCores.
    tb_cap = _round_up(max(8, tile_batch), 8)
    if rows8 >= 16:
        tb = min(tb_cap, _round_up(_cdiv(rows8, 2), 8))
    else:
        tb = rows8
    bp_rows = _round_up(rows8, tb)

    # Zero-pad batch + per-sample features, then lane-pack G samples per row.
    xp = jnp.zeros((bp_rows * G, S), x.dtype).at[:B, :input_dim].set(x)
    xp = xp.reshape(bp_rows, P)

    grid = (bp_rows // tb,)

    # Advisory cost estimate (bf16 weights, f32 activations, packed width).
    bytes_accessed = (2 * bp_rows * P * x.dtype.itemsize
                      + w_slab.size * w_slab.dtype.itemsize
                      + b_slab.size * b_slab.dtype.itemsize)
    cost = pl.CostEstimate(
        flops=2 * _NUM_LAYERS * bp_rows * P * P,
        transcendentals=6 * bp_rows * P,
        bytes_accessed=bytes_accessed,
    )

    out = pl.pallas_call(
        _mlp_ae_kernel,
        out_shape=jax.ShapeDtypeStruct((bp_rows, P), x.dtype),
        grid_spec=pltpu.PrefetchScalarGridSpec(
            num_scalar_prefetch=0,
            grid=grid,
            in_specs=[
                # Activations: one (TB, PAD) tile per grid step (auto-pipelined).
                pl.BlockSpec((tb, P), lambda i: (i, 0)),
                # Weight / bias slabs: constant block index -> DMA'd once,
                # resident in VMEM across all grid steps.
                pl.BlockSpec((_NUM_LAYERS, P, P), lambda i: (0, 0, 0)),
                pl.BlockSpec((_NUM_LAYERS, 1, P), lambda i: (0, 0, 0)),
            ],
            out_specs=pl.BlockSpec((tb, P), lambda i: (i, 0)),
        ),
        compiler_params=pltpu.CompilerParams(
            dimension_semantics=("parallel",),   # shard batch tiles across TCs
        ),
        cost_estimate=cost,
    )(xp, w_slab, b_slab)

    # Unpack lanes back to samples and strip batch/feature padding.
    return out.reshape(bp_rows * G, S)[:B, :input_dim]


def _orthogonal(key, rows, cols, dtype=jnp.float32):
    """Deterministic orthogonal init (mimics torch.nn.init.orthogonal_)."""
    a = jax.random.normal(key, (max(rows, cols), min(rows, cols)), dtype=jnp.float32)
    q, r = jnp.linalg.qr(a)
    s = jnp.sign(jnp.diag(r))
    s = jnp.where(s == 0, 1.0, s)
    q = q * s[None, :]
    if rows < cols:
        q = q.T
    return q[:rows, :cols].astype(dtype)


def _pick_sub_width(max_dim, pad=_PAD):
    for s in (8, 16, 32, 64, 128):
        if s >= max_dim and pad % s == 0:
            return s
    raise ValueError("layer width exceeds lane padding")


def make_params(key, input_dim, hidden_dim, latent_dim, pad=_PAD):
    """Build packed bf16 [8, pad, pad] weight and f32 [8, 1, pad] bias slabs.

    Each 128x128 weight slab is block-diagonal with G = pad // S copies of the
    real (S x S zero-padded) layer weight, so G samples can be lane-packed per
    row.  Weights are stored [in, out] (transposed from PyTorch's [out, in]).
    Also returns the sub-block width S and raw per-layer params for the
    pure-JAX reference.
    """
    dims = [
        (input_dim, hidden_dim),   # linear1
        (hidden_dim, hidden_dim),  # linear2
        (hidden_dim, hidden_dim),  # linear3
        (hidden_dim, latent_dim),  # linear4
        (latent_dim, hidden_dim),  # linear5
        (hidden_dim, hidden_dim),  # linear6
        (hidden_dim, hidden_dim),  # linear7
        (hidden_dim, input_dim),   # linear8
    ]
    max_dim = max(max(d) for d in dims)
    S = _pick_sub_width(max_dim, pad)
    G = pad // S
    eye_g = jnp.eye(G, dtype=jnp.float32)

    keys = jax.random.split(key, len(dims) * 2)
    w_slab = jnp.zeros((len(dims), pad, pad), jnp.float32)
    b_slab = jnp.zeros((len(dims), 1, pad), jnp.float32)
    raw = []
    for i, (din, dout) in enumerate(dims):
        # torch orthogonal_ acts on weight of shape [out, in]; store transpose.
        w_torch = _orthogonal(keys[2 * i], dout, din)          # [out, in]
        w = jnp.asarray(w_torch.T, dtype=jnp.float32)          # [in, out]
        # torch Linear default bias init: U(-1/sqrt(in), 1/sqrt(in)).
        bound = 1.0 / (din ** 0.5)
        b = jax.random.uniform(keys[2 * i + 1], (dout,),
                               minval=-bound, maxval=bound, dtype=jnp.float32)

        w_sub = jnp.zeros((S, S), jnp.float32).at[:din, :dout].set(w)
        b_sub = jnp.zeros((S,), jnp.float32).at[:dout].set(b)
        w_slab = w_slab.at[i].set(jnp.kron(eye_g, w_sub))      # block-diagonal
        b_slab = b_slab.at[i, 0].set(jnp.tile(b_sub, G))
        raw += [w, b[None, :]]

    return w_slab.astype(jnp.bfloat16), b_slab, S, raw


def _reference_forward(x, params, matmul_dtype=jnp.float32):
    """Pure-JAX reference (unpadded params).

    matmul_dtype=f32      -> exact module semantics.
    matmul_dtype=bfloat16 -> mimics the kernel's bf16 MXU operands.
    """
    (w1, b1, w2, b2, w3, b3, w4, b4,
     w5, b5, w6, b6, w7, b7, w8, b8) = params

    def lin(h, w, b):
        return jnp.dot(h.astype(matmul_dtype), w.astype(matmul_dtype),
                       preferred_element_type=jnp.float32) + b

    h = jnp.tanh(lin(x, w1, b1))
    h = h + jnp.tanh(lin(h, w2, b2))
    h = h + jnp.tanh(lin(h, w3, b3))
    z = lin(h, w4, b4)
    h = jnp.tanh(lin(z, w5, b5))
    h = h + jnp.tanh(lin(h, w6, b6))
    h = h + jnp.tanh(lin(h, w7, b7))
    return lin(h, w8, b8)


if __name__ == "__main__":
    input_dim, hidden_dim, latent_dim = 16, 32, 8
    batch = 8

    key = jax.random.PRNGKey(0)
    k_x, k_p = jax.random.split(key)
    x = jax.random.normal(k_x, (batch, input_dim), dtype=jnp.float32)
    w_slab, b_slab, sub_width, raw_params = make_params(
        k_p, input_dim, hidden_dim, latent_dim)

    fwd = jax.jit(functools.partial(mlp_autoencoder_forward,
                                    input_dim=input_dim, sub_width=sub_width))
    x_hat = fwd(x, w_slab, b_slab)
    jax.block_until_ready(x_hat)
    assert x_hat.shape == (batch, input_dim)

    # Semantic check vs. exact f32 module math (loose: bf16 MXU operands).
    ref_f32 = _reference_forward(x, raw_params, matmul_dtype=jnp.float32)
    err_f32 = float(jnp.max(jnp.abs(x_hat - ref_f32)))
    assert jnp.allclose(x_hat, ref_f32, atol=1e-1, rtol=1e-1), err_f32

    # Tight check vs. a reference that mimics the kernel's bf16 matmul operands.
    ref_bf16 = _reference_forward(x, raw_params, matmul_dtype=jnp.bfloat16)
    err_bf16 = float(jnp.max(jnp.abs(x_hat - ref_bf16)))
    assert jnp.allclose(x_hat, ref_bf16, atol=2e-2, rtol=2e-2), err_bf16

    print("KERNEL_OK")
</pallas_src>

<mosaic_0001>
module attributes {stable_mosaic.version = 11 : i64} {
  func.func @_mlp_ae_kernel(%arg0: i32, %arg1: memref<8x128xf32, #tpu.memory_space<vmem>>, %arg2: memref<8x128x128xbf16, #tpu.memory_space<vmem>>, %arg3: memref<8x1x128xf32, #tpu.memory_space<vmem>>, %arg4: memref<8x128xf32, #tpu.memory_space<vmem>>) attributes {dimension_semantics = [#tpu.dimension_semantics<parallel>], iteration_bounds = array<i64: 1>, scalar_prefetch = 0 : i64, scratch_operands = 0 : i64, tpu.core_type = #tpu.core_type<tc>, window_params = [{transform_indices = @transform_0, window_bounds = array<i64: 8, 128>}, {pipeline_mode = #tpu.pipeline_mode<synchronous>, transform_indices = @transform_1, window_bounds = array<i64: 8, 128, 128>}, {pipeline_mode = #tpu.pipeline_mode<synchronous>, transform_indices = @transform_2, window_bounds = array<i64: 8, 1, 128>}, {transform_indices = @transform_3, window_bounds = array<i64: 8, 128>}]} {
    %c0 = arith.constant 0 : index
    %c0_0 = arith.constant 0 : index
    %0 = vector.load %arg1[%c0, %c0_0] : memref<8x128xf32, #tpu.memory_space<vmem>>, vector<8x128xf32>
    %1 = arith.truncf %0 : vector<8x128xf32> to vector<8x128xbf16>
    %c0_1 = arith.constant 0 : index
    %c0_2 = arith.constant 0 : index
    %c0_3 = arith.constant 0 : index
    %2 = vector.load %arg2[%c0_1, %c0_2, %c0_3] : memref<8x128x128xbf16, #tpu.memory_space<vmem>>, vector<1x128x128xbf16>
    %3 = vector.shape_cast %2 : vector<1x128x128xbf16> to vector<128x128xbf16>
    %cst = arith.constant dense<0.000000e+00> : vector<8x128xf32>
    %4 = tpu.matmul %1, %3, %cst {dimension_numbers = #tpu.dot_dimension_numbers<[1], [0], [0], [1], [0, 0, 1, 1], [], []>} : vector<8x128xbf16>, vector<128x128xbf16>, vector<8x128xf32> -> vector<8x128xf32>
    %c0_4 = arith.constant 0 : index
    %c0_5 = arith.constant 0 : index
    %c0_6 = arith.constant 0 : index
    %5 = vector.load %arg3[%c0_4, %c0_5, %c0_6] : memref<8x1x128xf32, #tpu.memory_space<vmem>>, vector<1x1x128xf32>
    %6 = vector.shape_cast %5 : vector<1x1x128xf32> to vector<1x128xf32>
    %7 = vector.broadcast %6 : vector<1x128xf32> to vector<8x128xf32>
    %8 = arith.addf %4, %7 : vector<8x128xf32>
    %9 = math.tanh %8 : vector<8x128xf32>
    %10 = arith.truncf %9 : vector<8x128xf32> to vector<8x128xbf16>
    %c1 = arith.constant 1 : index
    %c0_7 = arith.constant 0 : index
    %c0_8 = arith.constant 0 : index
    %11 = vector.load %arg2[%c1, %c0_7, %c0_8] : memref<8x128x128xbf16, #tpu.memory_space<vmem>>, vector<1x128x128xbf16>
    %12 = vector.shape_cast %11 : vector<1x128x128xbf16> to vector<128x128xbf16>
    %cst_9 = arith.constant dense<0.000000e+00> : vector<8x128xf32>
    %13 = tpu.matmul %10, %12, %cst_9 {dimension_numbers = #tpu.dot_dimension_numbers<[1], [0], [0], [1], [0, 0, 1, 1], [], []>} : vector<8x128xbf16>, vector<128x128xbf16>, vector<8x128xf32> -> vector<8x128xf32>
    %c1_10 = arith.constant 1 : index
    %c0_11 = arith.constant 0 : index
    %c0_12 = arith.constant 0 : index
    %14 = vector.load %arg3[%c1_10, %c0_11, %c0_12] : memref<8x1x128xf32, #tpu.memory_space<vmem>>, vector<1x1x128xf32>
    %15 = vector.shape_cast %14 : vector<1x1x128xf32> to vector<1x128xf32>
    %16 = vector.broadcast %15 : vector<1x128xf32> to vector<8x128xf32>
    %17 = arith.addf %13, %16 : vector<8x128xf32>
    %18 = math.tanh %17 : vector<8x128xf32>
    %19 = arith.addf %9, %18 : vector<8x128xf32>
    %20 = arith.truncf %19 : vector<8x128xf32> to vector<8x128xbf16>
    %c2 = arith.constant 2 : index
    %c0_13 = arith.constant 0 : index
    %c0_14 = arith.constant 0 : index
    %21 = vector.load %arg2[%c2, %c0_13, %c0_14] : memref<8x128x128xbf16, #tpu.memory_space<vmem>>, vector<1x128x128xbf16>
    %22 = vector.shape_cast %21 : vector<1x128x128xbf16> to vector<128x128xbf16>
    %cst_15 = arith.constant dense<0.000000e+00> : vector<8x128xf32>
    %23 = tpu.matmul %20, %22, %cst_15 {dimension_numbers = #tpu.dot_dimension_numbers<[1], [0], [0], [1], [0, 0, 1, 1], [], []>} : vector<8x128xbf16>, vector<128x128xbf16>, vector<8x128xf32> -> vector<8x128xf32>
    %c2_16 = arith.constant 2 : index
    %c0_17 = arith.constant 0 : index
    %c0_18 = arith.constant 0 : index
    %24 = vector.load %arg3[%c2_16, %c0_17, %c0_18] : memref<8x1x128xf32, #tpu.memory_space<vmem>>, vector<1x1x128xf32>
    %25 = vector.shape_cast %24 : vector<1x1x128xf32> to vector<1x128xf32>
    %26 = vector.broadcast %25 : vector<1x128xf32> to vector<8x128xf32>
    %27 = arith.addf %23, %26 : vector<8x128xf32>
    %28 = math.tanh %27 : vector<8x128xf32>
    %29 = arith.addf %19, %28 : vector<8x128xf32>
    %30 = arith.truncf %29 : vector<8x128xf32> to vector<8x128xbf16>
    %c3 = arith.constant 3 : index
    %c0_19 = arith.constant 0 : index
    %c0_20 = arith.constant 0 : index
    %31 = vector.load %arg2[%c3, %c0_19, %c0_20] : memref<8x128x128xbf16, #tpu.memory_space<vmem>>, vector<1x128x128xbf16>
    %32 = vector.shape_cast %31 : vector<1x128x128xbf16> to vector<128x128xbf16>
    %cst_21 = arith.constant dense<0.000000e+00> : vector<8x128xf32>
    %33 = tpu.matmul %30, %32, %cst_21 {dimension_numbers = #tpu.dot_dimension_numbers<[1], [0], [0], [1], [0, 0, 1, 1], [], []>} : vector<8x128xbf16>, vector<128x128xbf16>, vector<8x128xf32> -> vector<8x128xf32>
    %c3_22 = arith.constant 3 : index
    %c0_23 = arith.constant 0 : index
    %c0_24 = arith.constant 0 : index
    %34 = vector.load %arg3[%c3_22, %c0_23, %c0_24] : memref<8x1x128xf32, #tpu.memory_space<vmem>>, vector<1x1x128xf32>
    %35 = vector.shape_cast %34 : vector<1x1x128xf32> to vector<1x128xf32>
    %36 = vector.broadcast %35 : vector<1x128xf32> to vector<8x128xf32>
    %37 = arith.addf %33, %36 : vector<8x128xf32>
    %38 = arith.truncf %37 : vector<8x128xf32> to vector<8x128xbf16>
    %c4 = arith.constant 4 : index
    %c0_25 = arith.constant 0 : index
    %c0_26 = arith.constant 0 : index
    %39 = vector.load %arg2[%c4, %c0_25, %c0_26] : memref<8x128x128xbf16, #tpu.memory_space<vmem>>, vector<1x128x128xbf16>
    %40 = vector.shape_cast %39 : vector<1x128x128xbf16> to vector<128x128xbf16>
    %cst_27 = arith.constant dense<0.000000e+00> : vector<8x128xf32>
    %41 = tpu.matmul %38, %40, %cst_27 {dimension_numbers = #tpu.dot_dimension_numbers<[1], [0], [0], [1], [0, 0, 1, 1], [], []>} : vector<8x128xbf16>, vector<128x128xbf16>, vector<8x128xf32> -> vector<8x128xf32>
    %c4_28 = arith.constant 4 : index
    %c0_29 = arith.constant 0 : index
    %c0_30 = arith.constant 0 : index
    %42 = vector.load %arg3[%c4_28, %c0_29, %c0_30] : memref<8x1x128xf32, #tpu.memory_space<vmem>>, vector<1x1x128xf32>
    %43 = vector.shape_cast %42 : vector<1x1x128xf32> to vector<1x128xf32>
    %44 = vector.broadcast %43 : vector<1x128xf32> to vector<8x128xf32>
    %45 = arith.addf %41, %44 : vector<8x128xf32>
    %46 = math.tanh %45 : vector<8x128xf32>
    %47 = arith.truncf %46 : vector<8x128xf32> to vector<8x128xbf16>
    %c5 = arith.constant 5 : index
    %c0_31 = arith.constant 0 : index
    %c0_32 = arith.constant 0 : index
    %48 = vector.load %arg2[%c5, %c0_31, %c0_32] : memref<8x128x128xbf16, #tpu.memory_space<vmem>>, vector<1x128x128xbf16>
    %49 = vector.shape_cast %48 : vector<1x128x128xbf16> to vector<128x128xbf16>
    %cst_33 = arith.constant dense<0.000000e+00> : vector<8x128xf32>
    %50 = tpu.matmul %47, %49, %cst_33 {dimension_numbers = #tpu.dot_dimension_numbers<[1], [0], [0], [1], [0, 0, 1, 1], [], []>} : vector<8x128xbf16>, vector<128x128xbf16>, vector<8x128xf32> -> vector<8x128xf32>
    %c5_34 = arith.constant 5 : index
    %c0_35 = arith.constant 0 : index
    %c0_36 = arith.constant 0 : index
    %51 = vector.load %arg3[%c5_34, %c0_35, %c0_36] : memref<8x1x128xf32, #tpu.memory_space<vmem>>, vector<1x1x128xf32>
    %52 = vector.shape_cast %51 : vector<1x1x128xf32> to vector<1x128xf32>
    %53 = vector.broadcast %52 : vector<1x128xf32> to vector<8x128xf32>
    %54 = arith.addf %50, %53 : vector<8x128xf32>
    %55 = math.tanh %54 : vector<8x128xf32>
    %56 = arith.addf %46, %55 : vector<8x128xf32>
    %57 = arith.truncf %56 : vector<8x128xf32> to vector<8x128xbf16>
    %c6 = arith.constant 6 : index
    %c0_37 = arith.constant 0 : index
    %c0_38 = arith.constant 0 : index
    %58 = vector.load %arg2[%c6, %c0_37, %c0_38] : memref<8x128x128xbf16, #tpu.memory_space<vmem>>, vector<1x128x128xbf16>
    %59 = vector.shape_cast %58 : vector<1x128x128xbf16> to vector<128x128xbf16>
    %cst_39 = arith.constant dense<0.000000e+00> : vector<8x128xf32>
    %60 = tpu.matmul %57, %59, %cst_39 {dimension_numbers = #tpu.dot_dimension_numbers<[1], [0], [0], [1], [0, 0, 1, 1], [], []>} : vector<8x128xbf16>, vector<128x128xbf16>, vector<8x128xf32> -> vector<8x128xf32>
    %c6_40 = arith.constant 6 : index
    %c0_41 = arith.constant 0 : index
    %c0_42 = arith.constant 0 : index
    %61 = vector.load %arg3[%c6_40, %c0_41, %c0_42] : memref<8x1x128xf32, #tpu.memory_space<vmem>>, vector<1x1x128xf32>
    %62 = vector.shape_cast %61 : vector<1x1x128xf32> to vector<1x128xf32>
    %63 = vector.broadcast %62 : vector<1x128xf32> to vector<8x128xf32>
    %64 = arith.addf %60, %63 : vector<8x128xf32>
    %65 = math.tanh %64 : vector<8x128xf32>
    %66 = arith.addf %56, %65 : vector<8x128xf32>
    %67 = arith.truncf %66 : vector<8x128xf32> to vector<8x128xbf16>
    %c7 = arith.constant 7 : index
    %c0_43 = arith.constant 0 : index
    %c0_44 = arith.constant 0 : index
    %68 = vector.load %arg2[%c7, %c0_43, %c0_44] : memref<8x128x128xbf16, #tpu.memory_space<vmem>>, vector<1x128x128xbf16>
    %69 = vector.shape_cast %68 : vector<1x128x128xbf16> to vector<128x128xbf16>
    %cst_45 = arith.constant dense<0.000000e+00> : vector<8x128xf32>
    %70 = tpu.matmul %67, %69, %cst_45 {dimension_numbers = #tpu.dot_dimension_numbers<[1], [0], [0], [1], [0, 0, 1, 1], [], []>} : vector<8x128xbf16>, vector<128x128xbf16>, vector<8x128xf32> -> vector<8x128xf32>
    %c7_46 = arith.constant 7 : index
    %c0_47 = arith.constant 0 : index
    %c0_48 = arith.constant 0 : index
    %71 = vector.load %arg3[%c7_46, %c0_47, %c0_48] : memref<8x1x128xf32, #tpu.memory_space<vmem>>, vector<1x1x128xf32>
    %72 = vector.shape_cast %71 : vector<1x1x128xf32> to vector<1x128xf32>
    %73 = vector.broadcast %72 : vector<1x128xf32> to vector<8x128xf32>
    %74 = arith.addf %70, %73 : vector<8x128xf32>
    %c0_49 = arith.constant 0 : index
    %c0_50 = arith.constant 0 : index
    %75 = vector.load %arg4[%c0_49, %c0_50] : memref<8x128xf32, #tpu.memory_space<vmem>>, vector<8x128xf32>
    tpu.vector_store %arg4[%c0_49, %c0_50], %74 {strides = array<i32>} : memref<8x128xf32, #tpu.memory_space<vmem>>, vector<8x128xf32>,
    return
  }
  func.func @transform_0(%arg0: i32) -> (i32, i32) {
    %c0_i32 = arith.constant 0 : i32
    %c0_i32_0 = arith.constant 0 : i32
    return %arg0, %c0_i32 : i32, i32
  }
  func.func @transform_1(%arg0: i32) -> (i32, i32, i32) {
    %c0_i32 = arith.constant 0 : i32
    %c0_i32_0 = arith.constant 0 : i32
    %c0_i32_1 = arith.constant 0 : i32
    %c0_i32_2 = arith.constant 0 : i32
    return %c0_i32, %c0_i32_0, %c0_i32_1 : i32, i32, i32
  }
  func.func @transform_2(%arg0: i32) -> (i32, i32, i32) {
    %c0_i32 = arith.constant 0 : i32
    %c0_i32_0 = arith.constant 0 : i32
    %c0_i32_1 = arith.constant 0 : i32
    %c0_i32_2 = arith.constant 0 : i32
    return %c0_i32, %c0_i32_0, %c0_i32_1 : i32, i32, i32
  }
  func.func @transform_3(%arg0: i32) -> (i32, i32) {
    %c0_i32 = arith.constant 0 : i32
    %c0_i32_0 = arith.constant 0 : i32
    return %arg0, %c0_i32 : i32, i32
  }
}

</mosaic_0001>

<llo_original>
// kernel: mlp_autoencoder_forward.1
$region0: #{mlp_autoencoder_forward.1}
  #allocation0 [shape = 'u32[]', space=smem, size = 0x4, offset = 0x4, fixed_abs, tag = 'smem constant byte address 0x4 - core index']
  #allocation1 [shape = 'u32[144,128]{1,0:T(1,128)}', space=vmem, size = 0x12000, scoped, tag = 'internal scratch']
  %s0 = inlined_call_operand.vmem [shape: f32[8,128], index: 0, kind: input, shape index: {}]
  %s1 = inlined_call_operand.hbm [shape: bf16[8,128,128], index: 1, kind: input, shape index: {}]
  %s2 = inlined_call_operand.vmem [shape: f32[8,1,128], index: 2, kind: input, shape index: {}]
  %s3 = inlined_call_operand.vmem [shape: f32[8,128], index: 3, kind: output, shape index: {}]
  %s4 = sld [smem:[#allocation0]]
  $region26: #{mlp_autoencoder_forward.1} parent=0
    _
  %s6 = ssub.s32 1, %s4
  %s7 = scalar_select 0, %s6, %s4
  $region1: #{mlp_autoencoder_forward.1} parent=0
    #allocation2 [shape = 'u8[262144]{0}', space=vmem, size = 0x40000, scoped, tag = 'input window, operand 1, single buffered']
    #allocation3 [shape = 's32[1]{0}', space=sflag, size = 0x4, scoped, tag = 'scoped memory for mlp_autoencoder_forward.1']
    %8 = vsyncpa [#allocation3], 0
    // Predicated region
    $region2: #{mlp_autoencoder_forward.1} parent=1 // pred_check
      _
    $region3: #{mlp_autoencoder_forward.1} parent=1 // pred_check_branch
      %10 = sbr.rel (0) target = $region5
    $region4: #{mlp_autoencoder_forward.1} parent=1 // pred_region
      _
    $region5: #{mlp_autoencoder_forward.1} parent=1 // pred_fallthru
      _
    // Predicated region
    $region6: #{mlp_autoencoder_forward.1} parent=1 // pred_check
      _
    $region7: #{mlp_autoencoder_forward.1} parent=1 // pred_check_branch
      %12 = sbr.rel (0) target = $region9
    $region8: #{mlp_autoencoder_forward.1} parent=1 // pred_region
      %s14 = ssub.s32 8192, 8192
      %15 = vsyncadd [#allocation3], %s14
      %s16 = sshll.u32 [#allocation2], 4
      %s17 = int_to_ptr.vmem [resolvable:$true] %s16
      %22 = dma.hbm_to_vmem [thread:$0]  %s1, 8192, %s17, [#allocation3], 64, 64, 4
    $region9: #{mlp_autoencoder_forward.1} parent=1 // pred_fallthru
      _
    // Predicated region
    $region10: #{mlp_autoencoder_forward.1} parent=1 // pred_check
      _
    $region11: #{mlp_autoencoder_forward.1} parent=1 // pred_check_branch
      %24 = sbr.rel (0) target = $region13
    $region12: #{mlp_autoencoder_forward.1} parent=1 // pred_region
      _
    $region13: #{mlp_autoencoder_forward.1} parent=1 // pred_fallthru
      _
    // Predicated region
    $region14: #{mlp_autoencoder_forward.1} parent=1 // pred_check
      _
    $region15: #{mlp_autoencoder_forward.1} parent=1 // pred_check_branch
      %26 = sbr.rel (0) target = $region17
    $region16: #{mlp_autoencoder_forward.1} parent=1 // pred_region
      %27 = dma.done [#allocation3], 8192
    $region17: #{mlp_autoencoder_forward.1} parent=1 // pred_fallthru
      _
    %v29 = vld [vmem:[%s0] sm:$0xff]
    %v30 = vpack.c.bf16 %v29, %v29
    %v31 = vld [vmem:[#allocation2] sm:$0xf]
    %v32 = vld [vmem:[#allocation2 + $0x4] sm:$0xf]
    %v33 = vld [vmem:[#allocation2 + $0x8] sm:$0xf]
    %v34 = vld [vmem:[#allocation2 + $0xc] sm:$0xf]
    %v35 = vld [vmem:[#allocation2 + $0x10] sm:$0xf]
    %v36 = vld [vmem:[#allocation2 + $0x14] sm:$0xf]
    %v37 = vld [vmem:[#allocation2 + $0x18] sm:$0xf]
    %v38 = vld [vmem:[#allocation2 + $0x1c] sm:$0xf]
    %v39 = vld [vmem:[#allocation2 + $0x20] sm:$0xf]
    %v40 = vld [vmem:[#allocation2 + $0x24] sm:$0xf]
    %v41 = vld [vmem:[#allocation2 + $0x28] sm:$0xf]
    %v42 = vld [vmem:[#allocation2 + $0x2c] sm:$0xf]
    %v43 = vld [vmem:[#allocation2 + $0x30] sm:$0xf]
    %v44 = vld [vmem:[#allocation2 + $0x34] sm:$0xf]
    %v45 = vld [vmem:[#allocation2 + $0x38] sm:$0xf]
    %v46 = vld [vmem:[#allocation2 + $0x3c] sm:$0xf]
    %v47 = vld [vmem:[%s2] sm:$0x1]
    %v49 = vlaneseq
    %v50 = vshrl.u32 %v49, 7
    %v51 = vsub.s32 0, %v50
    %v52 = vrot.slane %v47, %v51
    %v70 = vunpack.c.l.b16 %v31
    %v71 = vunpack.c.l.b16 %v32
    %v72 = vunpack.c.l.b16 %v33
    %v73 = vunpack.c.l.b16 %v34
    %v74 = vunpack.c.l.b16 %v35
    %v75 = vunpack.c.l.b16 %v36
    %v76 = vunpack.c.l.b16 %v37
    %v77 = vunpack.c.l.b16 %v38
    %v78 = vunpack.c.l.b16 %v39
    %v79 = vunpack.c.l.b16 %v40
    %v80 = vunpack.c.l.b16 %v41
    %v81 = vunpack.c.l.b16 %v42
    %v82 = vunpack.c.l.b16 %v43
    %v83 = vunpack.c.l.b16 %v44
    %v84 = vunpack.c.l.b16 %v45
    %v85 = vunpack.c.l.b16 %v46
    %v86 = vpack.c.b16 %v71, %v70
    %v87 = vpack.c.b16 %v73, %v72
    %v88 = vpack.c.b16 %v75, %v74
    %v89 = vpack.c.b16 %v77, %v76
    %v90 = vpack.c.b16 %v79, %v78
    %v91 = vpack.c.b16 %v81, %v80
    %v92 = vpack.c.b16 %v83, %v82
    %v93 = vpack.c.b16 %v85, %v84
    %102 = vmatprep.subr.bf16.mxu0 0
    %103 = vmatpush1.bf16.msra.mxu0 %v86
    %104 = vmatprep.subr.bf16.mxu0 0
    %105 = vmatpush1.bf16.msra.mxu0 %v87
    %106 = vmatprep.subr.bf16.mxu0 0
    %107 = vmatpush1.bf16.msra.mxu0 %v88
    %108 = vmatprep.subr.bf16.mxu0 0
    %109 = vmatpush1.bf16.msra.mxu0 %v89
    %110 = vmatprep.subr.bf16.mxu0 0
    %111 = vmatpush1.bf16.msra.mxu0 %v90
    %112 = vmatprep.subr.bf16.mxu0 0
    %113 = vmatpush1.bf16.msra.mxu0 %v91
    %114 = vmatprep.subr.bf16.mxu0 0
    %115 = vmatpush1.bf16.msra.mxu0 %v92
    %116 = vmatprep.subr.bf16.mxu0 0
    %117 = vmatpush1.bf16.msra.mxu0 %v93
    %118 = vmatprep.subr.bf16.mxu0 0
    %119 = vmatpush1.bf16.msra.mxu0 0
    %120 = vmatprep.subr.bf16.mxu0 0
    %121 = vmatpush1.bf16.msra.mxu0 0
    %122 = vmatprep.subr.bf16.mxu0 0
    %123 = vmatpush1.bf16.msra.mxu0 0
    %124 = vmatprep.subr.bf16.mxu0 0
    %125 = vmatpush1.bf16.msra.mxu0 0
    %126 = vmatprep.subr.bf16.mxu0 0
    %127 = vmatpush1.bf16.msra.mxu0 0
    %128 = vmatprep.subr.bf16.mxu0 0
    %129 = vmatpush1.bf16.msra.mxu0 0
    %130 = vmatprep.subr.bf16.mxu0 0
    %131 = vmatpush1.bf16.msra.mxu0 0
    %132 = vmatprep.subr.bf16.mxu0 0
    %133 = vmatpush1.bf16.msra.mxu0 0
    %134 = vmatprep.mubr.bf16.mxu0 0
    %135 = vmatmul.mubr.bf16.gmra.mrb[0].mxu0 %v30
    %v136 = vpop.f32.mrb[0].mxu0
    %v137 = vadd.f32 %v52, %v136
    %v138 = vpop.f32.mrb[0].mxu0
    %v139 = vpop.f32.mrb[0].mxu0
    %v140 = vpop.f32.mrb[0].mxu0
    %141 = vdwg.mxu0
    %v142 = vtanh.pop %v137
    %v143 = vpack.c.bf16 %v142, %v142
    %s144 = scalar_lea.vmem [#allocation2], 64
    %v145 = vld [vmem:[%s144] sm:$0xf]
    %v146 = vld [vmem:[%s144 + $0x4] sm:$0xf]
    %v147 = vld [vmem:[%s144 + $0x8] sm:$0xf]
    %v148 = vld [vmem:[%s144 + $0xc] sm:$0xf]
    %v149 = vld [vmem:[%s144 + $0x10] sm:$0xf]
    %v150 = vld [vmem:[%s144 + $0x14] sm:$0xf]
    %v151 = vld [vmem:[%s144 + $0x18] sm:$0xf]
    %v152 = vld [vmem:[%s144 + $0x1c] sm:$0xf]
    %v153 = vld [vmem:[%s144 + $0x20] sm:$0xf]
    %v154 = vld [vmem:[%s144 + $0x24] sm:$0xf]
    %v155 = vld [vmem:[%s144 + $0x28] sm:$0xf]
    %v156 = vld [vmem:[%s144 + $0x2c] sm:$0xf]
    %v157 = vld [vmem:[%s144 + $0x30] sm:$0xf]
    %v158 = vld [vmem:[%s144 + $0x34] sm:$0xf]
    %v159 = vld [vmem:[%s144 + $0x38] sm:$0xf]
    %v160 = vld [vmem:[%s144 + $0x3c] sm:$0xf]
    %s161 = scalar_lea.vmem %s2, 1
    %v162 = vld [vmem:[%s161] sm:$0x1]
    %v164 = vlaneseq
    %v165 = vshrl.u32 %v164, 7
    %v166 = vsub.s32 0, %v165
    %v167 = vrot.slane %v162, %v166
    %v185 = vunpack.c.l.b16 %v145
    %v186 = vunpack.c.l.b16 %v146
    %v187 = vunpack.c.l.b16 %v147
    %v188 = vunpack.c.l.b16 %v148
    %v189 = vunpack.c.l.b16 %v149
    %v190 = vunpack.c.l.b16 %v150
    %v191 = vunpack.c.l.b16 %v151
    %v192 = vunpack.c.l.b16 %v152
    %v193 = vunpack.c.l.b16 %v153
    %v194 = vunpack.c.l.b16 %v154
    %v195 = vunpack.c.l.b16 %v155
    %v196 = vunpack.c.l.b16 %v156
    %v197 = vunpack.c.l.b16 %v157
    %v198 = vunpack.c.l.b16 %v158
    %v199 = vunpack.c.l.b16 %v159
    %v200 = vunpack.c.l.b16 %v160
    %v201 = vpack.c.b16 %v186, %v185
    %v202 = vpack.c.b16 %v188, %v187
    %v203 = vpack.c.b16 %v190, %v189
    %v204 = vpack.c.b16 %v192, %v191
    %v205 = vpack.c.b16 %v194, %v193
    %v206 = vpack.c.b16 %v196, %v195
    %v207 = vpack.c.b16 %v198, %v197
    %v208 = vpack.c.b16 %v200, %v199
    %217 = vmatprep.subr.bf16.mxu0 0
    %218 = vmatpush1.bf16.msra.mxu0 %v201
    %219 = vmatprep.subr.bf16.mxu0 0
    %220 = vmatpush1.bf16.msra.mxu0 %v202
    %221 = vmatprep.subr.bf16.mxu0 0
    %222 = vmatpush1.bf16.msra.mxu0 %v203
    %223 = vmatprep.subr.bf16.mxu0 0
    %224 = vmatpush1.bf16.msra.mxu0 %v204
    %225 = vmatprep.subr.bf16.mxu0 0
    %226 = vmatpush1.bf16.msra.mxu0 %v205
    %227 = vmatprep.subr.bf16.mxu0 0
    %228 = vmatpush1.bf16.msra.mxu0 %v206
    %229 = vmatprep.subr.bf16.mxu0 0
    %230 = vmatpush1.bf16.msra.mxu0 %v207
    %231 = vmatprep.subr.bf16.mxu0 0
    %232 = vmatpush1.bf16.msra.mxu0 %v208
    %233 = vmatprep.subr.bf16.mxu0 0
    %234 = vmatpush1.bf16.msra.mxu0 0
    %235 = vmatprep.subr.bf16.mxu0 0
    %236 = vmatpush1.bf16.msra.mxu0 0
    %237 = vmatprep.subr.bf16.mxu0 0
    %238 = vmatpush1.bf16.msra.mxu0 0
    %239 = vmatprep.subr.bf16.mxu0 0
    %240 = vmatpush1.bf16.msra.mxu0 0
    %241 = vmatprep.subr.bf16.mxu0 0
    %242 = vmatpush1.bf16.msra.mxu0 0
    %243 = vmatprep.subr.bf16.mxu0 0
    %244 = vmatpush1.bf16.msra.mxu0 0
    %245 = vmatprep.subr.bf16.mxu0 0
    %246 = vmatpush1.bf16.msra.mxu0 0
    %247 = vmatprep.subr.bf16.mxu0 0
    %248 = vmatpush1.bf16.msra.mxu0 0
    %249 = vmatprep.mubr.bf16.mxu0 0
    %250 = vmatmul.mubr.bf16.gmra.mrb[0].mxu0 %v143
    %v251 = vpop.f32.mrb[0].mxu0
    %v252 = vadd.f32 %v167, %v251
    %v253 = vpop.f32.mrb[0].mxu0
    %v254 = vpop.f32.mrb[0].mxu0
    %v255 = vpop.f32.mrb[0].mxu0
    %256 = vdwg.mxu0
    %v257 = vtanh.pop %v252
    %v258 = vadd.f32 %v142, %v257
    %v259 = vpack.c.bf16 %v258, %v258
    %s260 = scalar_lea.vmem [#allocation2], 128
    %v261 = vld [vmem:[%s260] sm:$0xf]
    %v262 = vld [vmem:[%s260 + $0x4] sm:$0xf]
    %v263 = vld [vmem:[%s260 + $0x8] sm:$0xf]
    %v264 = vld [vmem:[%s260 + $0xc] sm:$0xf]
    %v265 = vld [vmem:[%s260 + $0x10] sm:$0xf]
    %v266 = vld [vmem:[%s260 + $0x14] sm:$0xf]
    %v267 = vld [vmem:[%s260 + $0x18] sm:$0xf]
    %v268 = vld [vmem:[%s260 + $0x1c] sm:$0xf]
    %v269 = vld [vmem:[%s260 + $0x20] sm:$0xf]
    %v270 = vld [vmem:[%s260 + $0x24] sm:$0xf]
    %v271 = vld [vmem:[%s260 + $0x28] sm:$0xf]
    %v272 = vld [vmem:[%s260 + $0x2c] sm:$0xf]
    %v273 = vld [vmem:[%s260 + $0x30] sm:$0xf]
    %v274 = vld [vmem:[%s260 + $0x34] sm:$0xf]
    %v275 = vld [vmem:[%s260 + $0x38] sm:$0xf]
    %v276 = vld [vmem:[%s260 + $0x3c] sm:$0xf]
    %s277 = scalar_lea.vmem %s2, 2
    %v278 = vld [vmem:[%s277] sm:$0x1]
    %v280 = vlaneseq
    %v281 = vshrl.u32 %v280, 7
    %v282 = vsub.s32 0, %v281
    %v283 = vrot.slane %v278, %v282
    %v301 = vunpack.c.l.b16 %v261
    %v302 = vunpack.c.l.b16 %v262
    %v303 = vunpack.c.l.b16 %v263
    %v304 = vunpack.c.l.b16 %v264
    %v305 = vunpack.c.l.b16 %v265
    %v306 = vunpack.c.l.b16 %v266
    %v307 = vunpack.c.l.b16 %v267
    %v308 = vunpack.c.l.b16 %v268
    %v309 = vunpack.c.l.b16 %v269
    %v310 = vunpack.c.l.b16 %v270
    %v311 = vunpack.c.l.b16 %v271
    %v312 = vunpack.c.l.b16 %v272
    %v313 = vunpack.c.l.b16 %v273
    %v314 = vunpack.c.l.b16 %v274
    %v315 = vunpack.c.l.b16 %v275
    %v316 = vunpack.c.l.b16 %v276
    %v317 = vpack.c.b16 %v302, %v301
    %v318 = vpack.c.b16 %v304, %v303
    %v319 = vpack.c.b16 %v306, %v305
    %v320 = vpack.c.b16 %v308, %v307
    %v321 = vpack.c.b16 %v310, %v309
    %v322 = vpack.c.b16 %v312, %v311
    %v323 = vpack.c.b16 %v314, %v313
    %v324 = vpack.c.b16 %v316, %v315
    %333 = vmatprep.subr.bf16.mxu0 0
    %334 = vmatpush1.bf16.msra.mxu0 %v317
    %335 = vmatprep.subr.bf16.mxu0 0
    %336 = vmatpush1.bf16.msra.mxu0 %v318
    %337 = vmatprep.subr.bf16.mxu0 0
    %338 = vmatpush1.bf16.msra.mxu0 %v319
    %339 = vmatprep.subr.bf16.mxu0 0
    %340 = vmatpush1.bf16.msra.mxu0 %v320
    %341 = vmatprep.subr.bf16.mxu0 0
    %342 = vmatpush1.bf16.msra.mxu0 %v321
    %343 = vmatprep.subr.bf16.mxu0 0
    %344 = vmatpush1.bf16.msra.mxu0 %v322
    %345 = vmatprep.subr.bf16.mxu0 0
    %346 = vmatpush1.bf16.msra.mxu0 %v323
    %347 = vmatprep.subr.bf16.mxu0 0
    %348 = vmatpush1.bf16.msra.mxu0 %v324
    %349 = vmatprep.subr.bf16.mxu0 0
    %350 = vmatpush1.bf16.msra.mxu0 0
    %351 = vmatprep.subr.bf16.mxu0 0
    %352 = vmatpush1.bf16.msra.mxu0 0
    %353 = vmatprep.subr.bf16.mxu0 0
    %354 = vmatpush1.bf16.msra.mxu0 0
    %355 = vmatprep.subr.bf16.mxu0 0
    %356 = vmatpush1.bf16.msra.mxu0 0
    %357 = vmatprep.subr.bf16.mxu0 0
    %358 = vmatpush1.bf16.msra.mxu0 0
    %359 = vmatprep.subr.bf16.mxu0 0
    %360 = vmatpush1.bf16.msra.mxu0 0
    %361 = vmatprep.subr.bf16.mxu0 0
    %362 = vmatpush1.bf16.msra.mxu0 0
    %363 = vmatprep.subr.bf16.mxu0 0
    %364 = vmatpush1.bf16.msra.mxu0 0
    %365 = vmatprep.mubr.bf16.mxu0 0
    %366 = vmatmul.mubr.bf16.gmra.mrb[0].mxu0 %v259
    %v367 = vpop.f32.mrb[0].mxu0
    %v368 = vadd.f32 %v283, %v367
    %v369 = vpop.f32.mrb[0].mxu0
    %v370 = vpop.f32.mrb[0].mxu0
    %v371 = vpop.f32.mrb[0].mxu0
    %372 = vdwg.mxu0
    %v373 = vtanh.pop %v368
    %v374 = vadd.f32 %v258, %v373
    %v375 = vpack.c.bf16 %v374, %v374
    %s376 = scalar_lea.vmem [#allocation2], 192
    %v377 = vld [vmem:[%s376] sm:$0xf]
    %v378 = vld [vmem:[%s376 + $0x4] sm:$0xf]
    %v379 = vld [vmem:[%s376 + $0x8] sm:$0xf]
    %v380 = vld [vmem:[%s376 + $0xc] sm:$0xf]
    %v381 = vld [vmem:[%s376 + $0x10] sm:$0xf]
    %v382 = vld [vmem:[%s376 + $0x14] sm:$0xf]
    %v383 = vld [vmem:[%s376 + $0x18] sm:$0xf]
    %v384 = vld [vmem:[%s376 + $0x1c] sm:$0xf]
    %v385 = vld [vmem:[%s376 + $0x20] sm:$0xf]
    %v386 = vld [vmem:[%s376 + $0x24] sm:$0xf]
    %v387 = vld [vmem:[%s376 + $0x28] sm:$0xf]
    %v388 = vld [vmem:[%s376 + $0x2c] sm:$0xf]
    %v389 = vld [vmem:[%s376 + $0x30] sm:$0xf]
    %v390 = vld [vmem:[%s376 + $0x34] sm:$0xf]
    %v391 = vld [vmem:[%s376 + $0x38] sm:$0xf]
    %v392 = vld [vmem:[%s376 + $0x3c] sm:$0xf]
    %s393 = scalar_lea.vmem %s2, 3
    %v394 = vld [vmem:[%s393] sm:$0x1]
    %v396 = vlaneseq
    %v397 = vshrl.u32 %v396, 7
    %v398 = vsub.s32 0, %v397
    %v399 = vrot.slane %v394, %v398
    %v417 = vunpack.c.l.b16 %v377
    %v418 = vunpack.c.l.b16 %v378
    %v419 = vunpack.c.l.b16 %v379
    %v420 = vunpack.c.l.b16 %v380
    %v421 = vunpack.c.l.b16 %v381
    %v422 = vunpack.c.l.b16 %v382
    %v423 = vunpack.c.l.b16 %v383
    %v424 = vunpack.c.l.b16 %v384
    %v425 = vunpack.c.l.b16 %v385
    %v426 = vunpack.c.l.b16 %v386
    %v427 = vunpack.c.l.b16 %v387
    %v428 = vunpack.c.l.b16 %v388
    %v429 = vunpack.c.l.b16 %v389
    %v430 = vunpack.c.l.b16 %v390
    %v431 = vunpack.c.l.b16 %v391
    %v432 = vunpack.c.l.b16 %v392
    %v433 = vpack.c.b16 %v418, %v417
    %v434 = vpack.c.b16 %v420, %v419
    %v435 = vpack.c.b16 %v422, %v421
    %v436 = vpack.c.b16 %v424, %v423
    %v437 = vpack.c.b16 %v426, %v425
    %v438 = vpack.c.b16 %v428, %v427
    %v439 = vpack.c.b16 %v430, %v429
    %v440 = vpack.c.b16 %v432, %v431
    %449 = vmatprep.subr.bf16.mxu0 0
    %450 = vmatpush1.bf16.msra.mxu0 %v433
    %451 = vmatprep.subr.bf16.mxu0 0
    %452 = vmatpush1.bf16.msra.mxu0 %v434
    %453 = vmatprep.subr.bf16.mxu0 0
    %454 = vmatpush1.bf16.msra.mxu0 %v435
    %455 = vmatprep.subr.bf16.mxu0 0
    %456 = vmatpush1.bf16.msra.mxu0 %v436
    %457 = vmatprep.subr.bf16.mxu0 0
    %458 = vmatpush1.bf16.msra.mxu0 %v437
    %459 = vmatprep.subr.bf16.mxu0 0
    %460 = vmatpush1.bf16.msra.mxu0 %v438
    %461 = vmatprep.subr.bf16.mxu0 0
    %462 = vmatpush1.bf16.msra.mxu0 %v439
    %463 = vmatprep.subr.bf16.mxu0 0
    %464 = vmatpush1.bf16.msra.mxu0 %v440
    %465 = vmatprep.subr.bf16.mxu0 0
    %466 = vmatpush1.bf16.msra.mxu0 0
    %467 = vmatprep.subr.bf16.mxu0 0
    %468 = vmatpush1.bf16.msra.mxu0 0
    %469 = vmatprep.subr.bf16.mxu0 0
    %470 = vmatpush1.bf16.msra.mxu0 0
    %471 = vmatprep.subr.bf16.mxu0 0
    %472 = vmatpush1.bf16.msra.mxu0 0
    %473 = vmatprep.subr.bf16.mxu0 0
    %474 = vmatpush1.bf16.msra.mxu0 0
    %475 = vmatprep.subr.bf16.mxu0 0
    %476 = vmatpush1.bf16.msra.mxu0 0
    %477 = vmatprep.subr.bf16.mxu0 0
    %478 = vmatpush1.bf16.msra.mxu0 0
    %479 = vmatprep.subr.bf16.mxu0 0
    %480 = vmatpush1.bf16.msra.mxu0 0
    %481 = vmatprep.mubr.bf16.mxu0 0
    %482 = vmatmul.mubr.bf16.gmra.mrb[0].mxu0 %v375
    %v483 = vpop.f32.mrb[0].mxu0
    %v484 = vadd.f32 %v399, %v483
    %v485 = vpop.f32.mrb[0].mxu0
    %v486 = vpop.f32.mrb[0].mxu0
    %v487 = vpop.f32.mrb[0].mxu0
    %488 = vdwg.mxu0
    %v489 = vpack.c.bf16 %v484, %v484
    %s490 = scalar_lea.vmem [#allocation2], 256
    %v491 = vld [vmem:[%s490] sm:$0xf]
    %v492 = vld [vmem:[%s490 + $0x4] sm:$0xf]
    %v493 = vld [vmem:[%s490 + $0x8] sm:$0xf]
    %v494 = vld [vmem:[%s490 + $0xc] sm:$0xf]
    %v495 = vld [vmem:[%s490 + $0x10] sm:$0xf]
    %v496 = vld [vmem:[%s490 + $0x14] sm:$0xf]
    %v497 = vld [vmem:[%s490 + $0x18] sm:$0xf]
    %v498 = vld [vmem:[%s490 + $0x1c] sm:$0xf]
    %v499 = vld [vmem:[%s490 + $0x20] sm:$0xf]
    %v500 = vld [vmem:[%s490 + $0x24] sm:$0xf]
    %v501 = vld [vmem:[%s490 + $0x28] sm:$0xf]
    %v502 = vld [vmem:[%s490 + $0x2c] sm:$0xf]
    %v503 = vld [vmem:[%s490 + $0x30] sm:$0xf]
    %v504 = vld [vmem:[%s490 + $0x34] sm:$0xf]
    %v505 = vld [vmem:[%s490 + $0x38] sm:$0xf]
    %v506 = vld [vmem:[%s490 + $0x3c] sm:$0xf]
    %s507 = scalar_lea.vmem %s2, 4
    %v508 = vld [vmem:[%s507] sm:$0x1]
    %v510 = vlaneseq
    %v511 = vshrl.u32 %v510, 7
    %v512 = vsub.s32 0, %v511
    %v513 = vrot.slane %v508, %v512
    %v531 = vunpack.c.l.b16 %v491
    %v532 = vunpack.c.l.b16 %v492
    %v533 = vunpack.c.l.b16 %v493
    %v534 = vunpack.c.l.b16 %v494
    %v535 = vunpack.c.l.b16 %v495
    %v536 = vunpack.c.l.b16 %v496
    %v537 = vunpack.c.l.b16 %v497
    %v538 = vunpack.c.l.b16 %v498
    %v539 = vunpack.c.l.b16 %v499
    %v540 = vunpack.c.l.b16 %v500
    %v541 = vunpack.c.l.b16 %v501
    %v542 = vunpack.c.l.b16 %v502
    %v543 = vunpack.c.l.b16 %v503
    %v544 = vunpack.c.l.b16 %v504
    %v545 = vunpack.c.l.b16 %v505
    %v546 = vunpack.c.l.b16 %v506
    %v547 = vpack.c.b16 %v532, %v531
    %v548 = vpack.c.b16 %v534, %v533
    %v549 = vpack.c.b16 %v536, %v535
    %v550 = vpack.c.b16 %v538, %v537
    %v551 = vpack.c.b16 %v540, %v539
    %v552 = vpack.c.b16 %v542, %v541
    %v553 = vpack.c.b16 %v544, %v543
    %v554 = vpack.c.b16 %v546, %v545
    %563 = vmatprep.subr.bf16.mxu0 0
    %564 = vmatpush1.bf16.msra.mxu0 %v547
    %565 = vmatprep.subr.bf16.mxu0 0
    %566 = vmatpush1.bf16.msra.mxu0 %v548
    %567 = vmatprep.subr.bf16.mxu0 0
    %568 = vmatpush1.bf16.msra.mxu0 %v549
    %569 = vmatprep.subr.bf16.mxu0 0
    %570 = vmatpush1.bf16.msra.mxu0 %v550
    %571 = vmatprep.subr.bf16.mxu0 0
    %572 = vmatpush1.bf16.msra.mxu0 %v551
    %573 = vmatprep.subr.bf16.mxu0 0
    %574 = vmatpush1.bf16.msra.mxu0 %v552
    %575 = vmatprep.subr.bf16.mxu0 0
    %576 = vmatpush1.bf16.msra.mxu0 %v553
    %577 = vmatprep.subr.bf16.mxu0 0
    %578 = vmatpush1.bf16.msra.mxu0 %v554
    %579 = vmatprep.subr.bf16.mxu0 0
    %580 = vmatpush1.bf16.msra.mxu0 0
    %581 = vmatprep.subr.bf16.mxu0 0
    %582 = vmatpush1.bf16.msra.mxu0 0
    %583 = vmatprep.subr.bf16.mxu0 0
    %584 = vmatpush1.bf16.msra.mxu0 0
    %585 = vmatprep.subr.bf16.mxu0 0
    %586 = vmatpush1.bf16.msra.mxu0 0
    %587 = vmatprep.subr.bf16.mxu0 0
    %588 = vmatpush1.bf16.msra.mxu0 0
    %589 = vmatprep.subr.bf16.mxu0 0
    %590 = vmatpush1.bf16.msra.mxu0 0
    %591 = vmatprep.subr.bf16.mxu0 0
    %592 = vmatpush1.bf16.msra.mxu0 0
    %593 = vmatprep.subr.bf16.mxu0 0
    %594 = vmatpush1.bf16.msra.mxu0 0
    %595 = vmatprep.mubr.bf16.mxu0 0
    %596 = vmatmul.mubr.bf16.gmra.mrb[0].mxu0 %v489
    %v597 = vpop.f32.mrb[0].mxu0
    %v598 = vadd.f32 %v513, %v597
    %v599 = vpop.f32.mrb[0].mxu0
    %v600 = vpop.f32.mrb[0].mxu0
    %v601 = vpop.f32.mrb[0].mxu0
    %602 = vdwg.mxu0
    %v603 = vtanh.pop %v598
    %v604 = vpack.c.bf16 %v603, %v603
    %s605 = scalar_lea.vmem [#allocation2], 320
    %v606 = vld [vmem:[%s605] sm:$0xf]
    %v607 = vld [vmem:[%s605 + $0x4] sm:$0xf]
    %v608 = vld [vmem:[%s605 + $0x8] sm:$0xf]
    %v609 = vld [vmem:[%s605 + $0xc] sm:$0xf]
    %v610 = vld [vmem:[%s605 + $0x10] sm:$0xf]
    %v611 = vld [vmem:[%s605 + $0x14] sm:$0xf]
    %v612 = vld [vmem:[%s605 + $0x18] sm:$0xf]
    %v613 = vld [vmem:[%s605 + $0x1c] sm:$0xf]
    %v614 = vld [vmem:[%s605 + $0x20] sm:$0xf]
    %v615 = vld [vmem:[%s605 + $0x24] sm:$0xf]
    %v616 = vld [vmem:[%s605 + $0x28] sm:$0xf]
    %v617 = vld [vmem:[%s605 + $0x2c] sm:$0xf]
    %v618 = vld [vmem:[%s605 + $0x30] sm:$0xf]
    %v619 = vld [vmem:[%s605 + $0x34] sm:$0xf]
    %v620 = vld [vmem:[%s605 + $0x38] sm:$0xf]
    %v621 = vld [vmem:[%s605 + $0x3c] sm:$0xf]
    %s622 = scalar_lea.vmem %s2, 5
    %v623 = vld [vmem:[%s622] sm:$0x1]
    %v625 = vlaneseq
    %v626 = vshrl.u32 %v625, 7
    %v627 = vsub.s32 0, %v626
    %v628 = vrot.slane %v623, %v627
    %v646 = vunpack.c.l.b16 %v606
    %v647 = vunpack.c.l.b16 %v607
    %v648 = vunpack.c.l.b16 %v608
    %v649 = vunpack.c.l.b16 %v609
    %v650 = vunpack.c.l.b16 %v610
    %v651 = vunpack.c.l.b16 %v611
    %v652 = vunpack.c.l.b16 %v612
    %v653 = vunpack.c.l.b16 %v613
    %v654 = vunpack.c.l.b16 %v614
    %v655 = vunpack.c.l.b16 %v615
    %v656 = vunpack.c.l.b16 %v616
    %v657 = vunpack.c.l.b16 %v617
    %v658 = vunpack.c.l.b16 %v618
    %v659 = vunpack.c.l.b16 %v619
    %v660 = vunpack.c.l.b16 %v620
    %v661 = vunpack.c.l.b16 %v621
    %v662 = vpack.c.b16 %v647, %v646
    %v663 = vpack.c.b16 %v649, %v648
    %v664 = vpack.c.b16 %v651, %v650
    %v665 = vpack.c.b16 %v653, %v652
    %v666 = vpack.c.b16 %v655, %v654
    %v667 = vpack.c.b16 %v657, %v656
    %v668 = vpack.c.b16 %v659, %v658
    %v669 = vpack.c.b16 %v661, %v660
    %678 = vmatprep.subr.bf16.mxu0 0
    %679 = vmatpush1.bf16.msra.mxu0 %v662
    %680 = vmatprep.subr.bf16.mxu0 0
    %681 = vmatpush1.bf16.msra.mxu0 %v663
    %682 = vmatprep.subr.bf16.mxu0 0
    %683 = vmatpush1.bf16.msra.mxu0 %v664
    %684 = vmatprep.subr.bf16.mxu0 0
    %685 = vmatpush1.bf16.msra.mxu0 %v665
    %686 = vmatprep.subr.bf16.mxu0 0
    %687 = vmatpush1.bf16.msra.mxu0 %v666
    %688 = vmatprep.subr.bf16.mxu0 0
    %689 = vmatpush1.bf16.msra.mxu0 %v667
    %690 = vmatprep.subr.bf16.mxu0 0
    %691 = vmatpush1.bf16.msra.mxu0 %v668
    %692 = vmatprep.subr.bf16.mxu0 0
    %693 = vmatpush1.bf16.msra.mxu0 %v669
    %694 = vmatprep.subr.bf16.mxu0 0
    %695 = vmatpush1.bf16.msra.mxu0 0
    %696 = vmatprep.subr.bf16.mxu0 0
    %697 = vmatpush1.bf16.msra.mxu0 0
    %698 = vmatprep.subr.bf16.mxu0 0
    %699 = vmatpush1.bf16.msra.mxu0 0
    %700 = vmatprep.subr.bf16.mxu0 0
    %701 = vmatpush1.bf16.msra.mxu0 0
    %702 = vmatprep.subr.bf16.mxu0 0
    %703 = vmatpush1.bf16.msra.mxu0 0
    %704 = vmatprep.subr.bf16.mxu0 0
    %705 = vmatpush1.bf16.msra.mxu0 0
    %706 = vmatprep.subr.bf16.mxu0 0
    %707 = vmatpush1.bf16.msra.mxu0 0
    %708 = vmatprep.subr.bf16.mxu0 0
    %709 = vmatpush1.bf16.msra.mxu0 0
    %710 = vmatprep.mubr.bf16.mxu0 0
    %711 = vmatmul.mubr.bf16.gmra.mrb[0].mxu0 %v604
    %v712 = vpop.f32.mrb[0].mxu0
    %v713 = vadd.f32 %v628, %v712
    %v714 = vpop.f32.mrb[0].mxu0
    %v715 = vpop.f32.mrb[0].mxu0
    %v716 = vpop.f32.mrb[0].mxu0
    %717 = vdwg.mxu0
    %v718 = vtanh.pop %v713
    %v719 = vadd.f32 %v603, %v718
    %v720 = vpack.c.bf16 %v719, %v719
    %s721 = scalar_lea.vmem [#allocation2], 384
    %v722 = vld [vmem:[%s721] sm:$0xf]
    %v723 = vld [vmem:[%s721 + $0x4] sm:$0xf]
    %v724 = vld [vmem:[%s721 + $0x8] sm:$0xf]
    %v725 = vld [vmem:[%s721 + $0xc] sm:$0xf]
    %v726 = vld [vmem:[%s721 + $0x10] sm:$0xf]
    %v727 = vld [vmem:[%s721 + $0x14] sm:$0xf]
    %v728 = vld [vmem:[%s721 + $0x18] sm:$0xf]
    %v729 = vld [vmem:[%s721 + $0x1c] sm:$0xf]
    %v730 = vld [vmem:[%s721 + $0x20] sm:$0xf]
    %v731 = vld [vmem:[%s721 + $0x24] sm:$0xf]
    %v732 = vld [vmem:[%s721 + $0x28] sm:$0xf]
    %v733 = vld [vmem:[%s721 + $0x2c] sm:$0xf]
    %v734 = vld [vmem:[%s721 + $0x30] sm:$0xf]
    %v735 = vld [vmem:[%s721 + $0x34] sm:$0xf]
    %v736 = vld [vmem:[%s721 + $0x38] sm:$0xf]
    %v737 = vld [vmem:[%s721 + $0x3c] sm:$0xf]
    %s738 = scalar_lea.vmem %s2, 6
    %v739 = vld [vmem:[%s738] sm:$0x1]
    %v741 = vlaneseq
    %v742 = vshrl.u32 %v741, 7
    %v743 = vsub.s32 0, %v742
    %v744 = vrot.slane %v739, %v743
    %v762 = vunpack.c.l.b16 %v722
    %v763 = vunpack.c.l.b16 %v723
    %v764 = vunpack.c.l.b16 %v724
    %v765 = vunpack.c.l.b16 %v725
    %v766 = vunpack.c.l.b16 %v726
    %v767 = vunpack.c.l.b16 %v727
    %v768 = vunpack.c.l.b16 %v728
    %v769 = vunpack.c.l.b16 %v729
    %v770 = vunpack.c.l.b16 %v730
    %v771 = vunpack.c.l.b16 %v731
    %v772 = vunpack.c.l.b16 %v732
    %v773 = vunpack.c.l.b16 %v733
    %v774 = vunpack.c.l.b16 %v734
    %v775 = vunpack.c.l.b16 %v735
    %v776 = vunpack.c.l.b16 %v736
    %v777 = vunpack.c.l.b16 %v737
    %v778 = vpack.c.b16 %v763, %v762
    %v779 = vpack.c.b16 %v765, %v764
    %v780 = vpack.c.b16 %v767, %v766
    %v781 = vpack.c.b16 %v769, %v768
    %v782 = vpack.c.b16 %v771, %v770
    %v783 = vpack.c.b16 %v773, %v772
    %v784 = vpack.c.b16 %v775, %v774
    %v785 = vpack.c.b16 %v777, %v776
    %794 = vmatprep.subr.bf16.mxu0 0
    %795 = vmatpush1.bf16.msra.mxu0 %v778
    %796 = vmatprep.subr.bf16.mxu0 0
    %797 = vmatpush1.bf16.msra.mxu0 %v779
    %798 = vmatprep.subr.bf16.mxu0 0
    %799 = vmatpush1.bf16.msra.mxu0 %v780
    %800 = vmatprep.subr.bf16.mxu0 0
    %801 = vmatpush1.bf16.msra.mxu0 %v781
    %802 = vmatprep.subr.bf16.mxu0 0
    %803 = vmatpush1.bf16.msra.mxu0 %v782
    %804 = vmatprep.subr.bf16.mxu0 0
    %805 = vmatpush1.bf16.msra.mxu0 %v783
    %806 = vmatprep.subr.bf16.mxu0 0
    %807 = vmatpush1.bf16.msra.mxu0 %v784
    %808 = vmatprep.subr.bf16.mxu0 0
    %809 = vmatpush1.bf16.msra.mxu0 %v785
    %810 = vmatprep.subr.bf16.mxu0 0
    %811 = vmatpush1.bf16.msra.mxu0 0
    %812 = vmatprep.subr.bf16.mxu0 0
    %813 = vmatpush1.bf16.msra.mxu0 0
    %814 = vmatprep.subr.bf16.mxu0 0
    %815 = vmatpush1.bf16.msra.mxu0 0
    %816 = vmatprep.subr.bf16.mxu0 0
    %817 = vmatpush1.bf16.msra.mxu0 0
    %818 = vmatprep.subr.bf16.mxu0 0
    %819 = vmatpush1.bf16.msra.mxu0 0
    %820 = vmatprep.subr.bf16.mxu0 0
    %821 = vmatpush1.bf16.msra.mxu0 0
    %822 = vmatprep.subr.bf16.mxu0 0
    %823 = vmatpush1.bf16.msra.mxu0 0
    %824 = vmatprep.subr.bf16.mxu0 0
    %825 = vmatpush1.bf16.msra.mxu0 0
    %826 = vmatprep.mubr.bf16.mxu0 0
    %827 = vmatmul.mubr.bf16.gmra.mrb[0].mxu0 %v720
    %v828 = vpop.f32.mrb[0].mxu0
    %v829 = vadd.f32 %v744, %v828
    %v830 = vpop.f32.mrb[0].mxu0
    %v831 = vpop.f32.mrb[0].mxu0
    %v832 = vpop.f32.mrb[0].mxu0
    %833 = vdwg.mxu0
    %v834 = vtanh.pop %v829
    %v835 = vadd.f32 %v719, %v834
    %v836 = vpack.c.bf16 %v835, %v835
    %s837 = scalar_lea.vmem [#allocation2], 448
    %v838 = vld [vmem:[%s837] sm:$0xf]
    %v839 = vld [vmem:[%s837 + $0x4] sm:$0xf]
    %v840 = vld [vmem:[%s837 + $0x8] sm:$0xf]
    %v841 = vld [vmem:[%s837 + $0xc] sm:$0xf]
    %v842 = vld [vmem:[%s837 + $0x10] sm:$0xf]
    %v843 = vld [vmem:[%s837 + $0x14] sm:$0xf]
    %v844 = vld [vmem:[%s837 + $0x18] sm:$0xf]
    %v845 = vld [vmem:[%s837 + $0x1c] sm:$0xf]
    %v846 = vld [vmem:[%s837 + $0x20] sm:$0xf]
    %v847 = vld [vmem:[%s837 + $0x24] sm:$0xf]
    %v848 = vld [vmem:[%s837 + $0x28] sm:$0xf]
    %v849 = vld [vmem:[%s837 + $0x2c] sm:$0xf]
    %v850 = vld [vmem:[%s837 + $0x30] sm:$0xf]
    %v851 = vld [vmem:[%s837 + $0x34] sm:$0xf]
    %v852 = vld [vmem:[%s837 + $0x38] sm:$0xf]
    %v853 = vld [vmem:[%s837 + $0x3c] sm:$0xf]
    %s854 = scalar_lea.vmem %s2, 7
    %v855 = vld [vmem:[%s854] sm:$0x1]
    %v857 = vlaneseq
    %v858 = vshrl.u32 %v857, 7
    %v859 = vsub.s32 0, %v858
    %v860 = vrot.slane %v855, %v859
    %v878 = vunpack.c.l.b16 %v838
    %v879 = vunpack.c.l.b16 %v839
    %v880 = vunpack.c.l.b16 %v840
    %v881 = vunpack.c.l.b16 %v841
    %v882 = vunpack.c.l.b16 %v842
    %v883 = vunpack.c.l.b16 %v843
    %v884 = vunpack.c.l.b16 %v844
    %v885 = vunpack.c.l.b16 %v845
    %v886 = vunpack.c.l.b16 %v846
    %v887 = vunpack.c.l.b16 %v847
    %v888 = vunpack.c.l.b16 %v848
    %v889 = vunpack.c.l.b16 %v849
    %v890 = vunpack.c.l.b16 %v850
    %v891 = vunpack.c.l.b16 %v851
    %v892 = vunpack.c.l.b16 %v852
    %v893 = vunpack.c.l.b16 %v853
    %v894 = vpack.c.b16 %v879, %v878
    %v895 = vpack.c.b16 %v881, %v880
    %v896 = vpack.c.b16 %v883, %v882
    %v897 = vpack.c.b16 %v885, %v884
    %v898 = vpack.c.b16 %v887, %v886
    %v899 = vpack.c.b16 %v889, %v888
    %v900 = vpack.c.b16 %v891, %v890
    %v901 = vpack.c.b16 %v893, %v892
    %910 = vmatprep.subr.bf16.mxu0 0
    %911 = vmatpush1.bf16.msra.mxu0 %v894
    %912 = vmatprep.subr.bf16.mxu0 0
    %913 = vmatpush1.bf16.msra.mxu0 %v895
    %914 = vmatprep.subr.bf16.mxu0 0
    %915 = vmatpush1.bf16.msra.mxu0 %v896
    %916 = vmatprep.subr.bf16.mxu0 0
    %917 = vmatpush1.bf16.msra.mxu0 %v897
    %918 = vmatprep.subr.bf16.mxu0 0
    %919 = vmatpush1.bf16.msra.mxu0 %v898
    %920 = vmatprep.subr.bf16.mxu0 0
    %921 = vmatpush1.bf16.msra.mxu0 %v899
    %922 = vmatprep.subr.bf16.mxu0 0
    %923 = vmatpush1.bf16.msra.mxu0 %v900
    %924 = vmatprep.subr.bf16.mxu0 0
    %925 = vmatpush1.bf16.msra.mxu0 %v901
    %926 = vmatprep.subr.bf16.mxu0 0
    %927 = vmatpush1.bf16.msra.mxu0 0
    %928 = vmatprep.subr.bf16.mxu0 0
    %929 = vmatpush1.bf16.msra.mxu0 0
    %930 = vmatprep.subr.bf16.mxu0 0
    %931 = vmatpush1.bf16.msra.mxu0 0
    %932 = vmatprep.subr.bf16.mxu0 0
    %933 = vmatpush1.bf16.msra.mxu0 0
    %934 = vmatprep.subr.bf16.mxu0 0
    %935 = vmatpush1.bf16.msra.mxu0 0
    %936 = vmatprep.subr.bf16.mxu0 0
    %937 = vmatpush1.bf16.msra.mxu0 0
    %938 = vmatprep.subr.bf16.mxu0 0
    %939 = vmatpush1.bf16.msra.mxu0 0
    %940 = vmatprep.subr.bf16.mxu0 0
    %941 = vmatpush1.bf16.msra.mxu0 0
    %942 = vmatprep.mubr.bf16.mxu0 0
    %943 = vmatmul.mubr.bf16.gmra.mrb[0].mxu0 %v836
    %v944 = vpop.f32.mrb[0].mxu0
    %v945 = vadd.f32 %v860, %v944
    %v946 = vpop.f32.mrb[0].mxu0
    %v947 = vpop.f32.mrb[0].mxu0
    %v948 = vpop.f32.mrb[0].mxu0
    %949 = vdwg.mxu0
    %950 = vst [vmem:[%s3] sm:$0xff] %v945
    // Predicated region
    $region18: #{mlp_autoencoder_forward.1} parent=1 // pred_check
      _
    $region19: #{mlp_autoencoder_forward.1} parent=1 // pred_check_branch
      %952 = sbr.rel (0) target = $region21
    $region20: #{mlp_autoencoder_forward.1} parent=1 // pred_region
      _
    $region21: #{mlp_autoencoder_forward.1} parent=1 // pred_fallthru
      _
    // Predicated region
    $region22: #{mlp_autoencoder_forward.1} parent=1 // pred_check
      _
    $region23: #{mlp_autoencoder_forward.1} parent=1 // pred_check_branch
      %954 = sbr.rel (0) target = $region25
    $region24: #{mlp_autoencoder_forward.1} parent=1 // pred_region
      _
    $region25: #{mlp_autoencoder_forward.1} parent=1 // pred_fallthru
      _
    %955 = vsyncpa [#allocation3], 1

</llo_original>
